<compile_context>
chip_gen: v7x
topology: tpu7x:2x2x1
jax: 0.10.0
libtpu: 0.0.40
codegen_flags: <defaults>
</compile_context>

<pallas_src>
import jax
import jax.numpy as jnp
from jax.experimental import pallas as pl
from jax.experimental.pallas import tpu as pltpu

_EPS = 1e-5
_BF16 = jnp.bfloat16


def _pick_tile(m, cap=512):
    """Largest divisor of m that is <= cap and a multiple of 8 (or m itself)."""
    cap = min(cap, m)
    for d in range(cap, 0, -1):
        if m % d == 0 and (d % 8 == 0 or d == m):
            return d
    return m


def _mosaic_params():
    # ~48 MiB keeps double-buffered tiles + weights under v7x's 64 MiB physical
    # VMEM and above the 32 MiB scoped default on v5e/v6e.
    return pltpu.CompilerParams(
        dimension_semantics=("parallel",),
        vmem_limit_bytes=48 * 1024 * 1024)


def _bn_scale_shift(stats_sum, stats_sq, count, gamma, beta):
    """Per-channel scale/shift from global sum / sum-of-squares (biased var)."""
    mean = stats_sum / count
    var = jnp.maximum(stats_sq / count - mean * mean, 0.0)
    scale = gamma * jax.lax.rsqrt(var + _EPS)
    shift = beta - mean * scale
    return (scale.reshape(1, -1).astype(jnp.float32),
            shift.reshape(1, -1).astype(jnp.float32))


# ----------------------------------------------------------------------------
# Kernel 1: 1x1 conv (matmul) + per-tile BN partial stats
# ----------------------------------------------------------------------------
def _matmul_stats_kernel(x_ref, w_ref, y_ref, st_ref):
    y = jnp.dot(x_ref[...], w_ref[...], preferred_element_type=jnp.float32)
    y_ref[...] = y.astype(y_ref.dtype)
    s = jnp.sum(y, axis=0, keepdims=True)
    q = jnp.sum(y * y, axis=0, keepdims=True)
    st_ref[...] = jnp.concatenate([s, q], axis=0)[None]


def _conv1x1_stats(x2d, w, *, tile_cap=512):
    m, k = x2d.shape
    n = w.shape[1]
    tm = _pick_tile(m, tile_cap)
    g = m // tm
    y, st = pl.pallas_call(
        _matmul_stats_kernel,
        grid=(g,),
        in_specs=[pl.BlockSpec((tm, k), lambda i: (i, 0)),
                  pl.BlockSpec((k, n), lambda i: (0, 0))],
        out_specs=[pl.BlockSpec((tm, n), lambda i: (i, 0)),
                   pl.BlockSpec((1, 2, n), lambda i: (i, 0, 0))],
        out_shape=[jax.ShapeDtypeStruct((m, n), _BF16),
                   jax.ShapeDtypeStruct((g, 2, n), jnp.float32)],
        compiler_params=_mosaic_params(),
    )(x2d, w)
    return y, st


# ----------------------------------------------------------------------------
# Kernel 2: 3x3 conv (stride, pad=1) as 9 shifted matmuls over a padded image
#           block, + per-image BN partial stats.  Grid is over the batch.
# ----------------------------------------------------------------------------
def _make_conv3x3_kernel(Ho, Wo, stride):
    def kernel(xp_ref, w_ref, y_ref, st_ref):
        cout = w_ref.shape[2]
        acc = jnp.zeros((Ho * Wo, cout), jnp.float32)
        for dy in range(3):
            for dx in range(3):
                if stride == 1:
                    xt = xp_ref[0, dy:dy + Ho, dx:dx + Wo, :]
                else:
                    # only the needed (strided) output positions are read
                    xt = xp_ref[0, pl.ds(dy, Ho, stride), pl.ds(dx, Wo, stride), :]
                xt = xt.reshape(Ho * Wo, xt.shape[-1])
                acc = acc + jnp.dot(xt, w_ref[dy * 3 + dx],
                                    preferred_element_type=jnp.float32)
        y_ref[...] = acc[None].astype(y_ref.dtype)
        s = jnp.sum(acc, axis=0, keepdims=True)
        q = jnp.sum(acc * acc, axis=0, keepdims=True)
        st_ref[...] = jnp.concatenate([s, q], axis=0)[None]
    return kernel


def _conv3x3_stats(o1p, w2, Ho, Wo, stride):
    # TODO(synk): for very large per-image H*W, add spatial tiling with a halo
    # DMA instead of one padded image per grid step.
    N, Hp, Wp, P = o1p.shape
    y, st = pl.pallas_call(
        _make_conv3x3_kernel(Ho, Wo, stride),
        grid=(N,),
        in_specs=[pl.BlockSpec((1, Hp, Wp, P), lambda n: (n, 0, 0, 0)),
                  pl.BlockSpec((9, P, P), lambda n: (0, 0, 0))],
        out_specs=[pl.BlockSpec((1, Ho * Wo, P), lambda n: (n, 0, 0)),
                   pl.BlockSpec((1, 2, P), lambda n: (n, 0, 0))],
        out_shape=[jax.ShapeDtypeStruct((N, Ho * Wo, P), _BF16),
                   jax.ShapeDtypeStruct((N, 2, P), jnp.float32)],
        compiler_params=_mosaic_params(),
    )(o1p, w2)
    return y, st


# ----------------------------------------------------------------------------
# Kernel 3: bn2+relu (applied on the fly) -> conv3 matmul, fused with the
#           projection-shortcut matmul; emits raw outputs + partial BN stats.
# ----------------------------------------------------------------------------
def _conv3_proj_kernel(y2_ref, s2_ref, b2_ref, w3_ref, xs_ref, wsc_ref,
                       y3_ref, ysc_ref, st_ref):
    o2 = jnp.maximum(y2_ref[...].astype(jnp.float32) * s2_ref[...] + b2_ref[...], 0.0)
    y3 = jnp.dot(o2.astype(_BF16), w3_ref[...], preferred_element_type=jnp.float32)
    ysc = jnp.dot(xs_ref[...], wsc_ref[...], preferred_element_type=jnp.float32)
    y3_ref[...] = y3.astype(y3_ref.dtype)
    ysc_ref[...] = ysc.astype(ysc_ref.dtype)
    st = jnp.concatenate([jnp.sum(y3, axis=0, keepdims=True),
                          jnp.sum(y3 * y3, axis=0, keepdims=True),
                          jnp.sum(ysc, axis=0, keepdims=True),
                          jnp.sum(ysc * ysc, axis=0, keepdims=True)], axis=0)
    st_ref[...] = st[None]


def _conv3_kernel(y2_ref, s2_ref, b2_ref, w3_ref, y3_ref, st_ref):
    o2 = jnp.maximum(y2_ref[...].astype(jnp.float32) * s2_ref[...] + b2_ref[...], 0.0)
    y3 = jnp.dot(o2.astype(_BF16), w3_ref[...], preferred_element_type=jnp.float32)
    y3_ref[...] = y3.astype(y3_ref.dtype)
    st = jnp.concatenate([jnp.sum(y3, axis=0, keepdims=True),
                          jnp.sum(y3 * y3, axis=0, keepdims=True)], axis=0)
    st_ref[...] = st[None]


def _conv3_proj(y2_2d, s2, b2, w3, xs, wsc, *, tile_cap=512):
    # TODO(synk): the raw y3/ysc round trip could be removed entirely with
    # Gram-based analytic BN stats (mean_y = colmean(o2)@W, E[y^2]=diag(W^T G W)).
    mo, p = y2_2d.shape
    cout = w3.shape[1]
    cin = xs.shape[1]
    tm = _pick_tile(mo, tile_cap)
    g = mo // tm
    y3, ysc, st = pl.pallas_call(
        _conv3_proj_kernel,
        grid=(g,),
        in_specs=[pl.BlockSpec((tm, p), lambda i: (i, 0)),
                  pl.BlockSpec((1, p), lambda i: (0, 0)),
                  pl.BlockSpec((1, p), lambda i: (0, 0)),
                  pl.BlockSpec((p, cout), lambda i: (0, 0)),
                  pl.BlockSpec((tm, cin), lambda i: (i, 0)),
                  pl.BlockSpec((cin, cout), lambda i: (0, 0))],
        out_specs=[pl.BlockSpec((tm, cout), lambda i: (i, 0)),
                   pl.BlockSpec((tm, cout), lambda i: (i, 0)),
                   pl.BlockSpec((1, 4, cout), lambda i: (i, 0, 0))],
        out_shape=[jax.ShapeDtypeStruct((mo, cout), _BF16),
                   jax.ShapeDtypeStruct((mo, cout), _BF16),
                   jax.ShapeDtypeStruct((g, 4, cout), jnp.float32)],
        compiler_params=_mosaic_params(),
    )(y2_2d, s2, b2, w3, xs, wsc)
    return y3, ysc, st


def _conv3_only(y2_2d, s2, b2, w3, *, tile_cap=512):
    mo, p = y2_2d.shape
    cout = w3.shape[1]
    tm = _pick_tile(mo, tile_cap)
    g = mo // tm
    y3, st = pl.pallas_call(
        _conv3_kernel,
        grid=(g,),
        in_specs=[pl.BlockSpec((tm, p), lambda i: (i, 0)),
                  pl.BlockSpec((1, p), lambda i: (0, 0)),
                  pl.BlockSpec((1, p), lambda i: (0, 0)),
                  pl.BlockSpec((p, cout), lambda i: (0, 0))],
        out_specs=[pl.BlockSpec((tm, cout), lambda i: (i, 0)),
                   pl.BlockSpec((1, 2, cout), lambda i: (i, 0, 0))],
        out_shape=[jax.ShapeDtypeStruct((mo, cout), _BF16),
                   jax.ShapeDtypeStruct((g, 2, cout), jnp.float32)],
        compiler_params=_mosaic_params(),
    )(y2_2d, s2, b2, w3)
    return y3, st


# ----------------------------------------------------------------------------
# Kernel 4: finalize — bn3(y3) + bnsc(ysc) (or + identity x), ReLU.
#           `preact` is only emitted (and written to HBM) when is_last.
# ----------------------------------------------------------------------------
def _make_finalize_kernel(has_proj, is_last):
    if has_proj:
        def kernel(y3_ref, s3_ref, b3_ref, ysc_ref, ssc_ref, bsc_ref, *out_refs):
            pre = (y3_ref[...].astype(jnp.float32) * s3_ref[...] + b3_ref[...]
                   + ysc_ref[...].astype(jnp.float32) * ssc_ref[...] + bsc_ref[...])
            out_refs[0][...] = jnp.maximum(pre, 0.0).astype(out_refs[0].dtype)
            if is_last:
                out_refs[1][...] = pre.astype(out_refs[1].dtype)
    else:
        def kernel(y3_ref, s3_ref, b3_ref, xid_ref, *out_refs):
            pre = (y3_ref[...].astype(jnp.float32) * s3_ref[...] + b3_ref[...]
                   + xid_ref[...].astype(jnp.float32))
            out_refs[0][...] = jnp.maximum(pre, 0.0).astype(out_refs[0].dtype)
            if is_last:
                out_refs[1][...] = pre.astype(out_refs[1].dtype)
    return kernel


def _finalize(y3, s3, b3, sc_op, ssc, bsc, *, has_proj, is_last, tile_cap=512):
    mo, cout = y3.shape
    tm = _pick_tile(mo, tile_cap)
    g = mo // tm

    row_spec = pl.BlockSpec((tm, cout), lambda i: (i, 0))
    vec_spec = pl.BlockSpec((1, cout), lambda i: (0, 0))
    in_specs = [row_spec, vec_spec, vec_spec]
    args = [y3, s3, b3]
    if has_proj:
        in_specs += [row_spec, vec_spec, vec_spec]
        args += [sc_op, ssc, bsc]
    else:
        in_specs += [row_spec]
        args += [sc_op]

    out_specs = [row_spec]
    out_shape = [jax.ShapeDtypeStruct((mo, cout), jnp.float32)]
    if is_last:
        out_specs.append(row_spec)
        out_shape.append(jax.ShapeDtypeStruct((mo, cout), jnp.float32))

    res = pl.pallas_call(
        _make_finalize_kernel(has_proj, is_last),
        grid=(g,),
        in_specs=in_specs,
        out_specs=out_specs,
        out_shape=out_shape,
        compiler_params=_mosaic_params(),
    )(*args)
    if is_last:
        return res[0], res[1]
    return res[0], None


# ----------------------------------------------------------------------------
# Bottleneck forward
# ----------------------------------------------------------------------------
def bottleneck_forward(x_nchw, params, stride=1, is_last=False):
    # NCHW -> NHWC boundary glue to match the PyTorch interface.
    # TODO(synk): keep activations NHWC across a full network to drop this pass.
    x = jnp.transpose(x_nchw, (0, 2, 3, 1)).astype(jnp.float32)
    N, H, W, Cin = x.shape
    P = params["w1"].shape[1]
    Cout = 4 * P
    M = N * H * W

    x2d = x.reshape(M, Cin).astype(_BF16)

    # conv1 (1x1) + bn1 stats
    y1, st1 = _conv1x1_stats(x2d, params["w1"].astype(_BF16))
    t1 = jnp.sum(st1, axis=0)
    s1, b1 = _bn_scale_shift(t1[0], t1[1], M, params["g1"], params["b1"])

    # bn1 + relu + zero-pad (one fused XLA elementwise pass; no 9x im2col ever
    # materialized -- the 3x3 taps are taken inside the conv2 kernel).
    o1 = jax.nn.relu(y1.astype(jnp.float32) * s1 + b1).astype(_BF16)
    o1p = jnp.pad(o1.reshape(N, H, W, P), ((0, 0), (1, 1), (1, 1), (0, 0)))

    # conv2 (3x3, stride, pad=1) + bn2 stats
    Ho = (H - 1) // stride + 1
    Wo = (W - 1) // stride + 1
    Mo = N * Ho * Wo
    w2 = params["w2"].astype(_BF16).reshape(9, P, P)       # HWIO -> (tap, Ci, Co)
    y2, st2 = _conv3x3_stats(o1p, w2, Ho, Wo, stride)
    t2 = jnp.sum(st2, axis=0)
    s2, b2 = _bn_scale_shift(t2[0], t2[1], Mo, params["g2"], params["b2"])
    y2_2d = y2.reshape(Mo, P)

    has_proj = (stride != 1) or (Cin != Cout)
    if has_proj:
        xs = x[:, ::stride, ::stride, :].reshape(Mo, Cin).astype(_BF16)
        y3, ysc, st3 = _conv3_proj(y2_2d, s2, b2, params["w3"].astype(_BF16),
                                   xs, params["wsc"].astype(_BF16))
        t3 = jnp.sum(st3, axis=0)
        s3, b3 = _bn_scale_shift(t3[0], t3[1], Mo, params["g3"], params["b3"])
        ssc, bsc = _bn_scale_shift(t3[2], t3[3], Mo, params["gsc"], params["bsc"])
        out2d, pre2d = _finalize(y3, s3, b3, ysc, ssc, bsc,
                                 has_proj=True, is_last=is_last)
    else:
        y3, st3 = _conv3_only(y2_2d, s2, b2, params["w3"].astype(_BF16))
        t3 = jnp.sum(st3, axis=0)
        s3, b3 = _bn_scale_shift(t3[0], t3[1], Mo, params["g3"], params["b3"])
        out2d, pre2d = _finalize(y3, s3, b3, x2d, None, None,
                                 has_proj=False, is_last=is_last)

    # TODO(synk): pad sub-128 channel counts to 128 lanes for unmasked stores.
    out = jnp.transpose(out2d.reshape(N, Ho, Wo, Cout), (0, 3, 1, 2))
    if is_last:
        pre = jnp.transpose(pre2d.reshape(N, Ho, Wo, Cout), (0, 3, 1, 2))
        return out, pre
    return out


# ----------------------------------------------------------------------------
# Deterministic parameter init (matches nn.Conv2d/BatchNorm2d shapes & defaults)
# ----------------------------------------------------------------------------
def init_params(key, in_planes, planes):
    exp = 4
    ks = jax.random.split(key, 4)

    def conv_w(k, shape, fan_in):
        return jax.random.normal(k, shape, jnp.float32) / jnp.sqrt(float(fan_in))

    return dict(
        w1=conv_w(ks[0], (in_planes, planes), in_planes),
        g1=jnp.ones((planes,), jnp.float32), b1=jnp.zeros((planes,), jnp.float32),
        w2=conv_w(ks[1], (3, 3, planes, planes), 9 * planes),
        g2=jnp.ones((planes,), jnp.float32), b2=jnp.zeros((planes,), jnp.float32),
        w3=conv_w(ks[2], (planes, exp * planes), planes),
        g3=jnp.ones((exp * planes,), jnp.float32), b3=jnp.zeros((exp * planes,), jnp.float32),
        wsc=conv_w(ks[3], (in_planes, exp * planes), in_planes),
        gsc=jnp.ones((exp * planes,), jnp.float32), bsc=jnp.zeros((exp * planes,), jnp.float32),
    )


# ----------------------------------------------------------------------------
# Pure-JAX reference (sanity check only)
# ----------------------------------------------------------------------------
def bottleneck_reference(x_nchw, params, stride=1, is_last=False):
    x = jnp.transpose(x_nchw, (0, 2, 3, 1)).astype(jnp.float32)

    def conv(v, w, s=1, p=0):
        return jax.lax.conv_general_dilated(
            v, w, (s, s), [(p, p), (p, p)],
            dimension_numbers=("NHWC", "HWIO", "NHWC"))

    def bn(y, g, b):
        m = jnp.mean(y, axis=(0, 1, 2), keepdims=True)
        v = jnp.mean((y - m) ** 2, axis=(0, 1, 2), keepdims=True)
        return (y - m) * jax.lax.rsqrt(v + _EPS) * g + b

    Cin = x.shape[-1]
    P = params["w1"].shape[1]
    Cout = 4 * P
    o = jax.nn.relu(bn(conv(x, params["w1"].reshape(1, 1, Cin, P)), params["g1"], params["b1"]))
    o = jax.nn.relu(bn(conv(o, params["w2"], stride, 1), params["g2"], params["b2"]))
    o = bn(conv(o, params["w3"].reshape(1, 1, P, Cout)), params["g3"], params["b3"])
    if stride != 1 or Cin != Cout:
        s = bn(conv(x, params["wsc"].reshape(1, 1, Cin, Cout), stride), params["gsc"], params["bsc"])
    else:
        s = x
    pre = o + s
    out = jax.nn.relu(pre)
    out = jnp.transpose(out, (0, 3, 1, 2))
    pre = jnp.transpose(pre, (0, 3, 1, 2))
    return (out, pre) if is_last else out


if __name__ == "__main__":
    key = jax.random.PRNGKey(0)
    kx, kp, kx2, kp2 = jax.random.split(key, 4)

    # Config 1: projection shortcut (Cin != 4*planes), is_last=True and False.
    N, Cin, H, W = 2, 4, 16, 16
    planes = 4
    x = jax.random.normal(kx, (N, Cin, H, W), jnp.float32)
    params = init_params(kp, Cin, planes)

    out, preact = bottleneck_forward(x, params, stride=1, is_last=True)
    jax.block_until_ready((out, preact))
    ref_out, ref_pre = bottleneck_reference(x, params, stride=1, is_last=True)
    assert out.shape == (N, 4 * planes, H, W) and preact.shape == out.shape
    assert float(jnp.max(jnp.abs(out - ref_out))) < 5e-2
    assert float(jnp.max(jnp.abs(preact - ref_pre))) < 5e-2

    out_nl = bottleneck_forward(x, params, stride=1, is_last=False)
    jax.block_until_ready(out_nl)
    assert float(jnp.max(jnp.abs(out_nl - ref_out))) < 5e-2

    # Config 2: identity shortcut (Cin == 4*planes, stride=1).
    Cin2 = 16
    x2 = jax.random.normal(kx2, (N, Cin2, H, W), jnp.float32)
    params2 = init_params(kp2, Cin2, planes)
    out_id = bottleneck_forward(x2, params2, stride=1, is_last=False)
    jax.block_until_ready(out_id)
    ref_id = bottleneck_reference(x2, params2, stride=1, is_last=False)
    assert float(jnp.max(jnp.abs(out_id - ref_id))) < 5e-2

    print("KERNEL_OK")
</pallas_src>

<mosaic_0001>
module attributes {stable_mosaic.version = 11 : i64} {
  func.func @_matmul_stats_kernel(%arg0: i32, %arg1: memref<512x4xbf16, #tpu.memory_space<vmem>>, %arg2: memref<4x4xbf16, #tpu.memory_space<vmem>>, %arg3: memref<512x4xbf16, #tpu.memory_space<vmem>>, %arg4: memref<1x2x4xf32, #tpu.memory_space<vmem>>) attributes {dimension_semantics = [#tpu.dimension_semantics<parallel>], iteration_bounds = array<i64: 1>, scalar_prefetch = 0 : i64, scratch_operands = 0 : i64, tpu.core_type = #tpu.core_type<tc>, window_params = [{transform_indices = @transform_0, window_bounds = array<i64: 512, 4>}, {pipeline_mode = #tpu.pipeline_mode<synchronous>, transform_indices = @transform_1, window_bounds = array<i64: 4, 4>}, {transform_indices = @transform_2, window_bounds = array<i64: 512, 4>}, {transform_indices = @transform_3, window_bounds = array<i64: 1, 2, 4>}]} {
    %c0 = arith.constant 0 : index
    %c0_0 = arith.constant 0 : index
    %0 = vector.load %arg1[%c0, %c0_0] : memref<512x4xbf16, #tpu.memory_space<vmem>>, vector<512x4xbf16>
    %c0_1 = arith.constant 0 : index
    %c0_2 = arith.constant 0 : index
    %1 = vector.load %arg2[%c0_1, %c0_2] : memref<4x4xbf16, #tpu.memory_space<vmem>>, vector<4x4xbf16>
    %cst = arith.constant dense<0.000000e+00> : vector<512x4xf32>
    %2 = tpu.matmul %0, %1, %cst {dimension_numbers = #tpu.dot_dimension_numbers<[1], [0], [0], [1], [0, 0, 1, 1], [], []>} : vector<512x4xbf16>, vector<4x4xbf16>, vector<512x4xf32> -> vector<512x4xf32>
    %3 = arith.truncf %2 : vector<512x4xf32> to vector<512x4xbf16>
    %c0_3 = arith.constant 0 : index
    %c0_4 = arith.constant 0 : index
    %4 = vector.load %arg3[%c0_3, %c0_4] : memref<512x4xbf16, #tpu.memory_space<vmem>>, vector<512x4xbf16>
    tpu.vector_store %arg3[%c0_3, %c0_4], %3 {strides = array<i32>} : memref<512x4xbf16, #tpu.memory_space<vmem>>, vector<512x4xbf16>,
    %cst_5 = arith.constant dense<0.000000e+00> : vector<4xf32>
    %5 = vector.multi_reduction <add>, %2, %cst_5 [0] : vector<512x4xf32> to vector<4xf32>
    %6 = vector.shape_cast %5 : vector<4xf32> to vector<1x4xf32>
    %7 = arith.mulf %2, %2 : vector<512x4xf32>
    %cst_6 = arith.constant dense<0.000000e+00> : vector<4xf32>
    %8 = vector.multi_reduction <add>, %7, %cst_6 [0] : vector<512x4xf32> to vector<4xf32>
    %9 = vector.shape_cast %8 : vector<4xf32> to vector<1x4xf32>
    %10 = tpu.concatenate %6, %9 in 0 : vector<1x4xf32>, vector<1x4xf32> -> vector<2x4xf32>
    %11 = vector.shape_cast %10 : vector<2x4xf32> to vector<1x2x4xf32>
    %c0_7 = arith.constant 0 : index
    %c0_8 = arith.constant 0 : index
    %c0_9 = arith.constant 0 : index
    %12 = vector.load %arg4[%c0_7, %c0_8, %c0_9] : memref<1x2x4xf32, #tpu.memory_space<vmem>>, vector<1x2x4xf32>
    tpu.vector_store %arg4[%c0_7, %c0_8, %c0_9], %11 {strides = array<i32>} : memref<1x2x4xf32, #tpu.memory_space<vmem>>, vector<1x2x4xf32>,
    return
  }
  func.func @transform_0(%arg0: i32) -> (i32, i32) {
    %c0_i32 = arith.constant 0 : i32
    %c0_i32_0 = arith.constant 0 : i32
    return %arg0, %c0_i32 : i32, i32
  }
  func.func @transform_1(%arg0: i32) -> (i32, i32) {
    %c0_i32 = arith.constant 0 : i32
    %c0_i32_0 = arith.constant 0 : i32
    %c0_i32_1 = arith.constant 0 : i32
    return %c0_i32, %c0_i32_0 : i32, i32
  }
  func.func @transform_2(%arg0: i32) -> (i32, i32) {
    %c0_i32 = arith.constant 0 : i32
    %c0_i32_0 = arith.constant 0 : i32
    return %arg0, %c0_i32 : i32, i32
  }
  func.func @transform_3(%arg0: i32) -> (i32, i32, i32) {
    %c0_i32 = arith.constant 0 : i32
    %c0_i32_0 = arith.constant 0 : i32
    %c0_i32_1 = arith.constant 0 : i32
    return %arg0, %c0_i32, %c0_i32_0 : i32, i32, i32
  }
}

</mosaic_0001>

<llo_original>
// kernel: tpu_custom_call.1
$region0: #{tpu_custom_call.1}
  #allocation0 [shape = 'u32[]', space=smem, size = 0x4, offset = 0x4, fixed_abs, tag = 'smem constant byte address 0x4 - core index']
  #allocation1 [shape = 'u32[144,128]{1,0:T(1,128)}', space=vmem, size = 0x12000, scoped, tag = 'internal scratch']
  %s0 = inlined_call_operand.vmem [shape: bf16[512,4], index: 0, kind: input, shape index: {}]
  %s1 = inlined_call_operand.vmem [shape: bf16[4,4], index: 1, kind: input, shape index: {}]
  %s2 = inlined_call_operand.vmem [shape: bf16[512,4], index: 2, kind: output, shape index: {0}]
  %s3 = inlined_call_operand.hbm [shape: f32[1,2,4], index: 3, kind: output, shape index: {1}]
  %4 = xla_tuple %s2, %s3
  %s5 = sld [smem:[#allocation0]]
  $region26: #{tpu_custom_call.1} parent=0
    _
  %s7 = ssub.s32 1, %s5
  %s8 = scalar_select 0, %s7, %s5
  $region1: #{tpu_custom_call.1} parent=0
    #allocation2 [shape = 'u8[1024]{0}', space=vmem, size = 0x400, scoped, tag = 'output window, operand 1, single buffered']
    #allocation3 [shape = 's32[1]{0}', space=sflag, size = 0x4, scoped, tag = 'scoped memory for tpu_custom_call.1']
    %9 = vsyncpa [#allocation3], 0
    // Predicated region
    $region2: #{tpu_custom_call.1} parent=1 // pred_check
      _
    $region3: #{tpu_custom_call.1} parent=1 // pred_check_branch
      %11 = sbr.rel (0) target = $region5
    $region4: #{tpu_custom_call.1} parent=1 // pred_region
      _
    $region5: #{tpu_custom_call.1} parent=1 // pred_fallthru
      _
    // Predicated region
    $region6: #{tpu_custom_call.1} parent=1 // pred_check
      _
    $region7: #{tpu_custom_call.1} parent=1 // pred_check_branch
      %13 = sbr.rel (0) target = $region9
    $region8: #{tpu_custom_call.1} parent=1 // pred_region
      _
    $region9: #{tpu_custom_call.1} parent=1 // pred_fallthru
      _
    %v15 = vld [vmem:[%s0] sm:$0xf]
    %v16 = vld [vmem:[%s0 + $0x4] sm:$0xf]
    %v17 = vld [vmem:[%s0 + $0x8] sm:$0xf]
    %v18 = vld [vmem:[%s0 + $0xc] sm:$0xf]
    %v19 = vld [vmem:[%s0 + $0x10] sm:$0xf]
    %v20 = vld [vmem:[%s0 + $0x14] sm:$0xf]
    %v21 = vld [vmem:[%s0 + $0x18] sm:$0xf]
    %v22 = vld [vmem:[%s0 + $0x1c] sm:$0xf]
    %v23 = vld [vmem:[%s0 + $0x20] sm:$0xf]
    %v24 = vld [vmem:[%s0 + $0x24] sm:$0xf]
    %v25 = vld [vmem:[%s0 + $0x28] sm:$0xf]
    %v26 = vld [vmem:[%s0 + $0x2c] sm:$0xf]
    %v27 = vld [vmem:[%s0 + $0x30] sm:$0xf]
    %v28 = vld [vmem:[%s0 + $0x34] sm:$0xf]
    %v29 = vld [vmem:[%s0 + $0x38] sm:$0xf]
    %v30 = vld [vmem:[%s0 + $0x3c] sm:$0xf]
    %v31 = vld [vmem:[%s0 + $0x40] sm:$0xf]
    %v32 = vld [vmem:[%s0 + $0x44] sm:$0xf]
    %v33 = vld [vmem:[%s0 + $0x48] sm:$0xf]
    %v34 = vld [vmem:[%s0 + $0x4c] sm:$0xf]
    %v35 = vld [vmem:[%s0 + $0x50] sm:$0xf]
    %v36 = vld [vmem:[%s0 + $0x54] sm:$0xf]
    %v37 = vld [vmem:[%s0 + $0x58] sm:$0xf]
    %v38 = vld [vmem:[%s0 + $0x5c] sm:$0xf]
    %v39 = vld [vmem:[%s0 + $0x60] sm:$0xf]
    %v40 = vld [vmem:[%s0 + $0x64] sm:$0xf]
    %v41 = vld [vmem:[%s0 + $0x68] sm:$0xf]
    %v42 = vld [vmem:[%s0 + $0x6c] sm:$0xf]
    %v43 = vld [vmem:[%s0 + $0x70] sm:$0xf]
    %v44 = vld [vmem:[%s0 + $0x74] sm:$0xf]
    %v45 = vld [vmem:[%s0 + $0x78] sm:$0xf]
    %v46 = vld [vmem:[%s0 + $0x7c] sm:$0xf]
    %v47 = vld [vmem:[%s0 + $0x80] sm:$0xf]
    %v48 = vld [vmem:[%s0 + $0x84] sm:$0xf]
    %v49 = vld [vmem:[%s0 + $0x88] sm:$0xf]
    %v50 = vld [vmem:[%s0 + $0x8c] sm:$0xf]
    %v51 = vld [vmem:[%s0 + $0x90] sm:$0xf]
    %v52 = vld [vmem:[%s0 + $0x94] sm:$0xf]
    %v53 = vld [vmem:[%s0 + $0x98] sm:$0xf]
    %v54 = vld [vmem:[%s0 + $0x9c] sm:$0xf]
    %v55 = vld [vmem:[%s0 + $0xa0] sm:$0xf]
    %v56 = vld [vmem:[%s0 + $0xa4] sm:$0xf]
    %v57 = vld [vmem:[%s0 + $0xa8] sm:$0xf]
    %v58 = vld [vmem:[%s0 + $0xac] sm:$0xf]
    %v59 = vld [vmem:[%s0 + $0xb0] sm:$0xf]
    %v60 = vld [vmem:[%s0 + $0xb4] sm:$0xf]
    %v61 = vld [vmem:[%s0 + $0xb8] sm:$0xf]
    %v62 = vld [vmem:[%s0 + $0xbc] sm:$0xf]
    %v63 = vld [vmem:[%s0 + $0xc0] sm:$0xf]
    %v64 = vld [vmem:[%s0 + $0xc4] sm:$0xf]
    %v65 = vld [vmem:[%s0 + $0xc8] sm:$0xf]
    %v66 = vld [vmem:[%s0 + $0xcc] sm:$0xf]
    %v67 = vld [vmem:[%s0 + $0xd0] sm:$0xf]
    %v68 = vld [vmem:[%s0 + $0xd4] sm:$0xf]
    %v69 = vld [vmem:[%s0 + $0xd8] sm:$0xf]
    %v70 = vld [vmem:[%s0 + $0xdc] sm:$0xf]
    %v71 = vld [vmem:[%s0 + $0xe0] sm:$0xf]
    %v72 = vld [vmem:[%s0 + $0xe4] sm:$0xf]
    %v73 = vld [vmem:[%s0 + $0xe8] sm:$0xf]
    %v74 = vld [vmem:[%s0 + $0xec] sm:$0xf]
    %v75 = vld [vmem:[%s0 + $0xf0] sm:$0xf]
    %v76 = vld [vmem:[%s0 + $0xf4] sm:$0xf]
    %v77 = vld [vmem:[%s0 + $0xf8] sm:$0xf]
    %v78 = vld [vmem:[%s0 + $0xfc] sm:$0xf]
    %v79 = vld [vmem:[%s1] sm:$0x3]
    %v144 = vunpack.c.l.b16 %v15
    %v145 = vunpack.c.l.b16 %v16
    %v146 = vunpack.c.l.b16 %v17
    %v147 = vunpack.c.l.b16 %v18
    %v148 = vunpack.c.l.b16 %v19
    %v149 = vunpack.c.l.b16 %v20
    %v150 = vunpack.c.l.b16 %v21
    %v151 = vunpack.c.l.b16 %v22
    %v152 = vunpack.c.l.b16 %v23
    %v153 = vunpack.c.l.b16 %v24
    %v154 = vunpack.c.l.b16 %v25
    %v155 = vunpack.c.l.b16 %v26
    %v156 = vunpack.c.l.b16 %v27
    %v157 = vunpack.c.l.b16 %v28
    %v158 = vunpack.c.l.b16 %v29
    %v159 = vunpack.c.l.b16 %v30
    %v160 = vunpack.c.l.b16 %v31
    %v161 = vunpack.c.l.b16 %v32
    %v162 = vunpack.c.l.b16 %v33
    %v163 = vunpack.c.l.b16 %v34
    %v164 = vunpack.c.l.b16 %v35
    %v165 = vunpack.c.l.b16 %v36
    %v166 = vunpack.c.l.b16 %v37
    %v167 = vunpack.c.l.b16 %v38
    %v168 = vunpack.c.l.b16 %v39
    %v169 = vunpack.c.l.b16 %v40
    %v170 = vunpack.c.l.b16 %v41
    %v171 = vunpack.c.l.b16 %v42
    %v172 = vunpack.c.l.b16 %v43
    %v173 = vunpack.c.l.b16 %v44
    %v174 = vunpack.c.l.b16 %v45
    %v175 = vunpack.c.l.b16 %v46
    %v176 = vunpack.c.l.b16 %v47
    %v177 = vunpack.c.l.b16 %v48
    %v178 = vunpack.c.l.b16 %v49
    %v179 = vunpack.c.l.b16 %v50
    %v180 = vunpack.c.l.b16 %v51
    %v181 = vunpack.c.l.b16 %v52
    %v182 = vunpack.c.l.b16 %v53
    %v183 = vunpack.c.l.b16 %v54
    %v184 = vunpack.c.l.b16 %v55
    %v185 = vunpack.c.l.b16 %v56
    %v186 = vunpack.c.l.b16 %v57
    %v187 = vunpack.c.l.b16 %v58
    %v188 = vunpack.c.l.b16 %v59
    %v189 = vunpack.c.l.b16 %v60
    %v190 = vunpack.c.l.b16 %v61
    %v191 = vunpack.c.l.b16 %v62
    %v192 = vunpack.c.l.b16 %v63
    %v193 = vunpack.c.l.b16 %v64
    %v194 = vunpack.c.l.b16 %v65
    %v195 = vunpack.c.l.b16 %v66
    %v196 = vunpack.c.l.b16 %v67
    %v197 = vunpack.c.l.b16 %v68
    %v198 = vunpack.c.l.b16 %v69
    %v199 = vunpack.c.l.b16 %v70
    %v200 = vunpack.c.l.b16 %v71
    %v201 = vunpack.c.l.b16 %v72
    %v202 = vunpack.c.l.b16 %v73
    %v203 = vunpack.c.l.b16 %v74
    %v204 = vunpack.c.l.b16 %v75
    %v205 = vunpack.c.l.b16 %v76
    %v206 = vunpack.c.l.b16 %v77
    %v207 = vunpack.c.l.b16 %v78
    %v208 = vpack.c.b16 %v145, %v144
    %v209 = vpack.c.b16 %v147, %v146
    %v210 = vpack.c.b16 %v149, %v148
    %v211 = vpack.c.b16 %v151, %v150
    %v212 = vpack.c.b16 %v153, %v152
    %v213 = vpack.c.b16 %v155, %v154
    %v214 = vpack.c.b16 %v157, %v156
    %v215 = vpack.c.b16 %v159, %v158
    %v216 = vpack.c.b16 %v161, %v160
    %v217 = vpack.c.b16 %v163, %v162
    %v218 = vpack.c.b16 %v165, %v164
    %v219 = vpack.c.b16 %v167, %v166
    %v220 = vpack.c.b16 %v169, %v168
    %v221 = vpack.c.b16 %v171, %v170
    %v222 = vpack.c.b16 %v173, %v172
    %v223 = vpack.c.b16 %v175, %v174
    %v224 = vpack.c.b16 %v177, %v176
    %v225 = vpack.c.b16 %v179, %v178
    %v226 = vpack.c.b16 %v181, %v180
    %v227 = vpack.c.b16 %v183, %v182
    %v228 = vpack.c.b16 %v185, %v184
    %v229 = vpack.c.b16 %v187, %v186
    %v230 = vpack.c.b16 %v189, %v188
    %v231 = vpack.c.b16 %v191, %v190
    %v232 = vpack.c.b16 %v193, %v192
    %v233 = vpack.c.b16 %v195, %v194
    %v234 = vpack.c.b16 %v197, %v196
    %v235 = vpack.c.b16 %v199, %v198
    %v236 = vpack.c.b16 %v201, %v200
    %v237 = vpack.c.b16 %v203, %v202
    %v238 = vpack.c.b16 %v205, %v204
    %v239 = vpack.c.b16 %v207, %v206
    %vm240 = vcmask 31744
    %v242 = vsel %vm240, %v208, 0
    %v245 = vsel %vm240, %v209, 0
    %v248 = vsel %vm240, %v210, 0
    %v251 = vsel %vm240, %v211, 0
    %v254 = vsel %vm240, %v212, 0
    %v257 = vsel %vm240, %v213, 0
    %v260 = vsel %vm240, %v214, 0
    %v263 = vsel %vm240, %v215, 0
    %v266 = vsel %vm240, %v216, 0
    %v269 = vsel %vm240, %v217, 0
    %v272 = vsel %vm240, %v218, 0
    %v275 = vsel %vm240, %v219, 0
    %v278 = vsel %vm240, %v220, 0
    %v281 = vsel %vm240, %v221, 0
    %v284 = vsel %vm240, %v222, 0
    %v287 = vsel %vm240, %v223, 0
    %v290 = vsel %vm240, %v224, 0
    %v293 = vsel %vm240, %v225, 0
    %v296 = vsel %vm240, %v226, 0
    %v299 = vsel %vm240, %v227, 0
    %v302 = vsel %vm240, %v228, 0
    %v305 = vsel %vm240, %v229, 0
    %v308 = vsel %vm240, %v230, 0
    %v311 = vsel %vm240, %v231, 0
    %v314 = vsel %vm240, %v232, 0
    %v317 = vsel %vm240, %v233, 0
    %v320 = vsel %vm240, %v234, 0
    %v323 = vsel %vm240, %v235, 0
    %v326 = vsel %vm240, %v236, 0
    %v329 = vsel %vm240, %v237, 0
    %v332 = vsel %vm240, %v238, 0
    %v335 = vsel %vm240, %v239, 0
    %vm337 = vcmask 1041408
    %v339 = vsel %vm337, %v79, 0
    %341 = vmatprep.subr.bf16.mxu0 0
    %342 = vmatpush1.bf16.msra.mxu0 %v339
    %343 = vmatprep.subr.bf16.mxu0 0
    %344 = vmatpush1.bf16.msra.mxu0 0
    %345 = vmatprep.subr.bf16.mxu0 0
    %346 = vmatpush1.bf16.msra.mxu0 0
    %347 = vmatprep.subr.bf16.mxu0 0
    %348 = vmatpush1.bf16.msra.mxu0 0
    %349 = vmatprep.subr.bf16.mxu0 0
    %350 = vmatpush1.bf16.msra.mxu0 0
    %351 = vmatprep.subr.bf16.mxu0 0
    %352 = vmatpush1.bf16.msra.mxu0 0
    %353 = vmatprep.subr.bf16.mxu0 0
    %354 = vmatpush1.bf16.msra.mxu0 0
    %355 = vmatprep.subr.bf16.mxu0 0
    %356 = vmatpush1.bf16.msra.mxu0 0
    %357 = vmatprep.subr.bf16.mxu0 0
    %358 = vmatpush1.bf16.msra.mxu0 0
    %359 = vmatprep.subr.bf16.mxu0 0
    %360 = vmatpush1.bf16.msra.mxu0 0
    %361 = vmatprep.subr.bf16.mxu0 0
    %362 = vmatpush1.bf16.msra.mxu0 0
    %363 = vmatprep.subr.bf16.mxu0 0
    %364 = vmatpush1.bf16.msra.mxu0 0
    %365 = vmatprep.subr.bf16.mxu0 0
    %366 = vmatpush1.bf16.msra.mxu0 0
    %367 = vmatprep.subr.bf16.mxu0 0
    %368 = vmatpush1.bf16.msra.mxu0 0
    %369 = vmatprep.subr.bf16.mxu0 0
    %370 = vmatpush1.bf16.msra.mxu0 0
    %371 = vmatprep.subr.bf16.mxu0 0
    %372 = vmatpush1.bf16.msra.mxu0 0
    %373 = vmatprep.mubr.bf16.mxu0 0
    %374 = vmatmul.mubr.bf16.gmra.mrb[0].mxu0 %v242
    %v375 = vpop.f32.mrb[0].mxu0
    %v376 = vadd.f32 0.0, %v375
    %v377 = vpop.f32.mrb[0].mxu0
    %v378 = vpop.f32.mrb[0].mxu0
    %v379 = vadd.f32 0.0, %v378
    %v380 = vpop.f32.mrb[0].mxu0
    %381 = vmatprep.mubr.bf16.mxu0 0
    %382 = vmatmul.mubr.bf16.gmra.mrb[0].mxu0 %v245
    %v383 = vpop.f32.mrb[0].mxu0
    %v384 = vadd.f32 0.0, %v383
    %v385 = vpop.f32.mrb[0].mxu0
    %v386 = vpop.f32.mrb[0].mxu0
    %v387 = vadd.f32 0.0, %v386
    %v388 = vpop.f32.mrb[0].mxu0
    %389 = vmatprep.mubr.bf16.mxu0 0
    %390 = vmatmul.mubr.bf16.gmra.mrb[0].mxu0 %v248
    %v391 = vpop.f32.mrb[0].mxu0
    %v392 = vadd.f32 0.0, %v391
    %v393 = vpop.f32.mrb[0].mxu0
    %v394 = vpop.f32.mrb[0].mxu0
    %v395 = vadd.f32 0.0, %v394
    %v396 = vpop.f32.mrb[0].mxu0
    %397 = vmatprep.mubr.bf16.mxu0 0
    %398 = vmatmul.mubr.bf16.gmra.mrb[0].mxu0 %v251
    %v399 = vpop.f32.mrb[0].mxu0
    %v400 = vadd.f32 0.0, %v399
    %v401 = vpop.f32.mrb[0].mxu0
    %v402 = vpop.f32.mrb[0].mxu0
    %v403 = vadd.f32 0.0, %v402
    %v404 = vpop.f32.mrb[0].mxu0
    %405 = vmatprep.mubr.bf16.mxu0 0
    %406 = vmatmul.mubr.bf16.gmra.mrb[0].mxu0 %v254
    %v407 = vpop.f32.mrb[0].mxu0
    %v408 = vadd.f32 0.0, %v407
    %v409 = vpop.f32.mrb[0].mxu0
    %v410 = vpop.f32.mrb[0].mxu0
    %v411 = vadd.f32 0.0, %v410
    %v412 = vpop.f32.mrb[0].mxu0
    %413 = vmatprep.mubr.bf16.mxu0 0
    %414 = vmatmul.mubr.bf16.gmra.mrb[0].mxu0 %v257
    %v415 = vpop.f32.mrb[0].mxu0
    %v416 = vadd.f32 0.0, %v415
    %v417 = vpop.f32.mrb[0].mxu0
    %v418 = vpop.f32.mrb[0].mxu0
    %v419 = vadd.f32 0.0, %v418
    %v420 = vpop.f32.mrb[0].mxu0
    %421 = vmatprep.mubr.bf16.mxu0 0
    %422 = vmatmul.mubr.bf16.gmra.mrb[0].mxu0 %v260
    %v423 = vpop.f32.mrb[0].mxu0
    %v424 = vadd.f32 0.0, %v423
    %v425 = vpop.f32.mrb[0].mxu0
    %v426 = vpop.f32.mrb[0].mxu0
    %v427 = vadd.f32 0.0, %v426
    %v428 = vpop.f32.mrb[0].mxu0
    %429 = vmatprep.mubr.bf16.mxu0 0
    %430 = vmatmul.mubr.bf16.gmra.mrb[0].mxu0 %v263
    %v431 = vpop.f32.mrb[0].mxu0
    %v432 = vadd.f32 0.0, %v431
    %v433 = vpop.f32.mrb[0].mxu0
    %v434 = vpop.f32.mrb[0].mxu0
    %v435 = vadd.f32 0.0, %v434
    %v436 = vpop.f32.mrb[0].mxu0
    %437 = vmatprep.mubr.bf16.mxu0 0
    %438 = vmatmul.mubr.bf16.gmra.mrb[0].mxu0 %v266
    %v439 = vpop.f32.mrb[0].mxu0
    %v440 = vadd.f32 0.0, %v439
    %v441 = vpop.f32.mrb[0].mxu0
    %v442 = vpop.f32.mrb[0].mxu0
    %v443 = vadd.f32 0.0, %v442
    %v444 = vpop.f32.mrb[0].mxu0
    %445 = vmatprep.mubr.bf16.mxu0 0
    %446 = vmatmul.mubr.bf16.gmra.mrb[0].mxu0 %v269
    %v447 = vpop.f32.mrb[0].mxu0
    %v448 = vadd.f32 0.0, %v447
    %v449 = vpop.f32.mrb[0].mxu0
    %v450 = vpop.f32.mrb[0].mxu0
    %v451 = vadd.f32 0.0, %v450
    %v452 = vpop.f32.mrb[0].mxu0
    %453 = vmatprep.mubr.bf16.mxu0 0
    %454 = vmatmul.mubr.bf16.gmra.mrb[0].mxu0 %v272
    %v455 = vpop.f32.mrb[0].mxu0
    %v456 = vadd.f32 0.0, %v455
    %v457 = vpop.f32.mrb[0].mxu0
    %v458 = vpop.f32.mrb[0].mxu0
    %v459 = vadd.f32 0.0, %v458
    %v460 = vpop.f32.mrb[0].mxu0
    %461 = vmatprep.mubr.bf16.mxu0 0
    %462 = vmatmul.mubr.bf16.gmra.mrb[0].mxu0 %v275
    %v463 = vpop.f32.mrb[0].mxu0
    %v464 = vadd.f32 0.0, %v463
    %v465 = vpop.f32.mrb[0].mxu0
    %v466 = vpop.f32.mrb[0].mxu0
    %v467 = vadd.f32 0.0, %v466
    %v468 = vpop.f32.mrb[0].mxu0
    %469 = vmatprep.mubr.bf16.mxu0 0
    %470 = vmatmul.mubr.bf16.gmra.mrb[0].mxu0 %v278
    %v471 = vpop.f32.mrb[0].mxu0
    %v472 = vadd.f32 0.0, %v471
    %v473 = vpop.f32.mrb[0].mxu0
    %v474 = vpop.f32.mrb[0].mxu0
    %v475 = vadd.f32 0.0, %v474
    %v476 = vpop.f32.mrb[0].mxu0
    %477 = vmatprep.mubr.bf16.mxu0 0
    %478 = vmatmul.mubr.bf16.gmra.mrb[0].mxu0 %v281
    %v479 = vpop.f32.mrb[0].mxu0
    %v480 = vadd.f32 0.0, %v479
    %v481 = vpop.f32.mrb[0].mxu0
    %v482 = vpop.f32.mrb[0].mxu0
    %v483 = vadd.f32 0.0, %v482
    %v484 = vpop.f32.mrb[0].mxu0
    %485 = vmatprep.mubr.bf16.mxu0 0
    %486 = vmatmul.mubr.bf16.gmra.mrb[0].mxu0 %v284
    %v487 = vpop.f32.mrb[0].mxu0
    %v488 = vadd.f32 0.0, %v487
    %v489 = vpop.f32.mrb[0].mxu0
    %v490 = vpop.f32.mrb[0].mxu0
    %v491 = vadd.f32 0.0, %v490
    %v492 = vpop.f32.mrb[0].mxu0
    %493 = vmatprep.mubr.bf16.mxu0 0
    %494 = vmatmul.mubr.bf16.gmra.mrb[0].mxu0 %v287
    %v495 = vpop.f32.mrb[0].mxu0
    %v496 = vadd.f32 0.0, %v495
    %v497 = vpop.f32.mrb[0].mxu0
    %v498 = vpop.f32.mrb[0].mxu0
    %v499 = vadd.f32 0.0, %v498
    %v500 = vpop.f32.mrb[0].mxu0
    %501 = vmatprep.mubr.bf16.mxu0 0
    %502 = vmatmul.mubr.bf16.gmra.mrb[0].mxu0 %v290
    %v503 = vpop.f32.mrb[0].mxu0
    %v504 = vadd.f32 0.0, %v503
    %v505 = vpop.f32.mrb[0].mxu0
    %v506 = vpop.f32.mrb[0].mxu0
    %v507 = vadd.f32 0.0, %v506
    %v508 = vpop.f32.mrb[0].mxu0
    %509 = vmatprep.mubr.bf16.mxu0 0
    %510 = vmatmul.mubr.bf16.gmra.mrb[0].mxu0 %v293
    %v511 = vpop.f32.mrb[0].mxu0
    %v512 = vadd.f32 0.0, %v511
    %v513 = vpop.f32.mrb[0].mxu0
    %v514 = vpop.f32.mrb[0].mxu0
    %v515 = vadd.f32 0.0, %v514
    %v516 = vpop.f32.mrb[0].mxu0
    %517 = vmatprep.mubr.bf16.mxu0 0
    %518 = vmatmul.mubr.bf16.gmra.mrb[0].mxu0 %v296
    %v519 = vpop.f32.mrb[0].mxu0
    %v520 = vadd.f32 0.0, %v519
    %v521 = vpop.f32.mrb[0].mxu0
    %v522 = vpop.f32.mrb[0].mxu0
    %v523 = vadd.f32 0.0, %v522
    %v524 = vpop.f32.mrb[0].mxu0
    %525 = vmatprep.mubr.bf16.mxu0 0
    %526 = vmatmul.mubr.bf16.gmra.mrb[0].mxu0 %v299
    %v527 = vpop.f32.mrb[0].mxu0
    %v528 = vadd.f32 0.0, %v527
    %v529 = vpop.f32.mrb[0].mxu0
    %v530 = vpop.f32.mrb[0].mxu0
    %v531 = vadd.f32 0.0, %v530
    %v532 = vpop.f32.mrb[0].mxu0
    %533 = vmatprep.mubr.bf16.mxu0 0
    %534 = vmatmul.mubr.bf16.gmra.mrb[0].mxu0 %v302
    %v535 = vpop.f32.mrb[0].mxu0
    %v536 = vadd.f32 0.0, %v535
    %v537 = vpop.f32.mrb[0].mxu0
    %v538 = vpop.f32.mrb[0].mxu0
    %v539 = vadd.f32 0.0, %v538
    %v540 = vpop.f32.mrb[0].mxu0
    %541 = vmatprep.mubr.bf16.mxu0 0
    %542 = vmatmul.mubr.bf16.gmra.mrb[0].mxu0 %v305
    %v543 = vpop.f32.mrb[0].mxu0
    %v544 = vadd.f32 0.0, %v543
    %v545 = vpop.f32.mrb[0].mxu0
    %v546 = vpop.f32.mrb[0].mxu0
    %v547 = vadd.f32 0.0, %v546
    %v548 = vpop.f32.mrb[0].mxu0
    %549 = vmatprep.mubr.bf16.mxu0 0
    %550 = vmatmul.mubr.bf16.gmra.mrb[0].mxu0 %v308
    %v551 = vpop.f32.mrb[0].mxu0
    %v552 = vadd.f32 0.0, %v551
    %v553 = vpop.f32.mrb[0].mxu0
    %v554 = vpop.f32.mrb[0].mxu0
    %v555 = vadd.f32 0.0, %v554
    %v556 = vpop.f32.mrb[0].mxu0
    %557 = vmatprep.mubr.bf16.mxu0 0
    %558 = vmatmul.mubr.bf16.gmra.mrb[0].mxu0 %v311
    %v559 = vpop.f32.mrb[0].mxu0
    %v560 = vadd.f32 0.0, %v559
    %v561 = vpop.f32.mrb[0].mxu0
    %v562 = vpop.f32.mrb[0].mxu0
    %v563 = vadd.f32 0.0, %v562
    %v564 = vpop.f32.mrb[0].mxu0
    %565 = vmatprep.mubr.bf16.mxu0 0
    %566 = vmatmul.mubr.bf16.gmra.mrb[0].mxu0 %v314
    %v567 = vpop.f32.mrb[0].mxu0
    %v568 = vadd.f32 0.0, %v567
    %v569 = vpop.f32.mrb[0].mxu0
    %v570 = vpop.f32.mrb[0].mxu0
    %v571 = vadd.f32 0.0, %v570
    %v572 = vpop.f32.mrb[0].mxu0
    %573 = vmatprep.mubr.bf16.mxu0 0
    %574 = vmatmul.mubr.bf16.gmra.mrb[0].mxu0 %v317
    %v575 = vpop.f32.mrb[0].mxu0
    %v576 = vadd.f32 0.0, %v575
    %v577 = vpop.f32.mrb[0].mxu0
    %v578 = vpop.f32.mrb[0].mxu0
    %v579 = vadd.f32 0.0, %v578
    %v580 = vpop.f32.mrb[0].mxu0
    %581 = vmatprep.mubr.bf16.mxu0 0
    %582 = vmatmul.mubr.bf16.gmra.mrb[0].mxu0 %v320
    %v583 = vpop.f32.mrb[0].mxu0
    %v584 = vadd.f32 0.0, %v583
    %v585 = vpop.f32.mrb[0].mxu0
    %v586 = vpop.f32.mrb[0].mxu0
    %v587 = vadd.f32 0.0, %v586
    %v588 = vpop.f32.mrb[0].mxu0
    %589 = vmatprep.mubr.bf16.mxu0 0
    %590 = vmatmul.mubr.bf16.gmra.mrb[0].mxu0 %v323
    %v591 = vpop.f32.mrb[0].mxu0
    %v592 = vadd.f32 0.0, %v591
    %v593 = vpop.f32.mrb[0].mxu0
    %v594 = vpop.f32.mrb[0].mxu0
    %v595 = vadd.f32 0.0, %v594
    %v596 = vpop.f32.mrb[0].mxu0
    %597 = vmatprep.mubr.bf16.mxu0 0
    %598 = vmatmul.mubr.bf16.gmra.mrb[0].mxu0 %v326
    %v599 = vpop.f32.mrb[0].mxu0
    %v600 = vadd.f32 0.0, %v599
    %v601 = vpop.f32.mrb[0].mxu0
    %v602 = vpop.f32.mrb[0].mxu0
    %v603 = vadd.f32 0.0, %v602
    %v604 = vpop.f32.mrb[0].mxu0
    %605 = vmatprep.mubr.bf16.mxu0 0
    %606 = vmatmul.mubr.bf16.gmra.mrb[0].mxu0 %v329
    %v607 = vpop.f32.mrb[0].mxu0
    %v608 = vadd.f32 0.0, %v607
    %v609 = vpop.f32.mrb[0].mxu0
    %v610 = vpop.f32.mrb[0].mxu0
    %v611 = vadd.f32 0.0, %v610
    %v612 = vpop.f32.mrb[0].mxu0
    %613 = vmatprep.mubr.bf16.mxu0 0
    %614 = vmatmul.mubr.bf16.gmra.mrb[0].mxu0 %v332
    %v615 = vpop.f32.mrb[0].mxu0
    %v616 = vadd.f32 0.0, %v615
    %v617 = vpop.f32.mrb[0].mxu0
    %v618 = vpop.f32.mrb[0].mxu0
    %v619 = vadd.f32 0.0, %v618
    %v620 = vpop.f32.mrb[0].mxu0
    %621 = vmatprep.mubr.bf16.mxu0 0
    %622 = vmatmul.mubr.bf16.gmra.mrb[0].mxu0 %v335
    %v623 = vpop.f32.mrb[0].mxu0
    %v624 = vadd.f32 0.0, %v623
    %v625 = vpop.f32.mrb[0].mxu0
    %v626 = vpop.f32.mrb[0].mxu0
    %v627 = vadd.f32 0.0, %v626
    %v628 = vpop.f32.mrb[0].mxu0
    %629 = vdwg.mxu0
    %v630 = vpack.c.bf16 %v379, %v376
    %v631 = vpack.c.bf16 %v387, %v384
    %v632 = vpack.c.bf16 %v395, %v392
    %v633 = vpack.c.bf16 %v403, %v400
    %v634 = vpack.c.bf16 %v411, %v408
    %v635 = vpack.c.bf16 %v419, %v416
    %v636 = vpack.c.bf16 %v427, %v424
    %v637 = vpack.c.bf16 %v435, %v432
    %v638 = vpack.c.bf16 %v443, %v440
    %v639 = vpack.c.bf16 %v451, %v448
    %v640 = vpack.c.bf16 %v459, %v456
    %v641 = vpack.c.bf16 %v467, %v464
    %v642 = vpack.c.bf16 %v475, %v472
    %v643 = vpack.c.bf16 %v483, %v480
    %v644 = vpack.c.bf16 %v491, %v488
    %v645 = vpack.c.bf16 %v499, %v496
    %v646 = vpack.c.bf16 %v507, %v504
    %v647 = vpack.c.bf16 %v515, %v512
    %v648 = vpack.c.bf16 %v523, %v520
    %v649 = vpack.c.bf16 %v531, %v528
    %v650 = vpack.c.bf16 %v539, %v536
    %v651 = vpack.c.bf16 %v547, %v544
    %v652 = vpack.c.bf16 %v555, %v552
    %v653 = vpack.c.bf16 %v563, %v560
    %v654 = vpack.c.bf16 %v571, %v568
    %v655 = vpack.c.bf16 %v579, %v576
    %v656 = vpack.c.bf16 %v587, %v584
    %v657 = vpack.c.bf16 %v595, %v592
    %v658 = vpack.c.bf16 %v603, %v600
    %v659 = vpack.c.bf16 %v611, %v608
    %v660 = vpack.c.bf16 %v619, %v616
    %v661 = vpack.c.bf16 %v627, %v624
    %v694 = vunpack.c.l.b16 %v630
    %v695 = vunpack.c.h.b16 %v630
    %v696 = vunpack.c.l.b16 %v631
    %v697 = vunpack.c.h.b16 %v631
    %v698 = vunpack.c.l.b16 %v632
    %v699 = vunpack.c.h.b16 %v632
    %v700 = vunpack.c.l.b16 %v633
    %v701 = vunpack.c.h.b16 %v633
    %v702 = vunpack.c.l.b16 %v634
    %v703 = vunpack.c.h.b16 %v634
    %v704 = vunpack.c.l.b16 %v635
    %v705 = vunpack.c.h.b16 %v635
    %v706 = vunpack.c.l.b16 %v636
    %v707 = vunpack.c.h.b16 %v636
    %v708 = vunpack.c.l.b16 %v637
    %v709 = vunpack.c.h.b16 %v637
    %v710 = vunpack.c.l.b16 %v638
    %v711 = vunpack.c.h.b16 %v638
    %v712 = vunpack.c.l.b16 %v639
    %v713 = vunpack.c.h.b16 %v639
    %v714 = vunpack.c.l.b16 %v640
    %v715 = vunpack.c.h.b16 %v640
    %v716 = vunpack.c.l.b16 %v641
    %v717 = vunpack.c.h.b16 %v641
    %v718 = vunpack.c.l.b16 %v642
    %v719 = vunpack.c.h.b16 %v642
    %v720 = vunpack.c.l.b16 %v643
    %v721 = vunpack.c.h.b16 %v643
    %v722 = vunpack.c.l.b16 %v644
    %v723 = vunpack.c.h.b16 %v644
    %v724 = vunpack.c.l.b16 %v645
    %v725 = vunpack.c.h.b16 %v645
    %v726 = vunpack.c.l.b16 %v646
    %v727 = vunpack.c.h.b16 %v646
    %v728 = vunpack.c.l.b16 %v647
    %v729 = vunpack.c.h.b16 %v647
    %v730 = vunpack.c.l.b16 %v648
    %v731 = vunpack.c.h.b16 %v648
    %v732 = vunpack.c.l.b16 %v649
    %v733 = vunpack.c.h.b16 %v649
    %v734 = vunpack.c.l.b16 %v650
    %v735 = vunpack.c.h.b16 %v650
    %v736 = vunpack.c.l.b16 %v651
    %v737 = vunpack.c.h.b16 %v651
    %v738 = vunpack.c.l.b16 %v652
    %v739 = vunpack.c.h.b16 %v652
    %v740 = vunpack.c.l.b16 %v653
    %v741 = vunpack.c.h.b16 %v653
    %v742 = vunpack.c.l.b16 %v654
    %v743 = vunpack.c.h.b16 %v654
    %v744 = vunpack.c.l.b16 %v655
    %v745 = vunpack.c.h.b16 %v655
    %v746 = vunpack.c.l.b16 %v656
    %v747 = vunpack.c.h.b16 %v656
    %v748 = vunpack.c.l.b16 %v657
    %v749 = vunpack.c.h.b16 %v657
    %v750 = vunpack.c.l.b16 %v658
    %v751 = vunpack.c.h.b16 %v658
    %v752 = vunpack.c.l.b16 %v659
    %v753 = vunpack.c.h.b16 %v659
    %v754 = vunpack.c.l.b16 %v660
    %v755 = vunpack.c.h.b16 %v660
    %v756 = vunpack.c.l.b16 %v661
    %v757 = vunpack.c.h.b16 %v661
    %v758 = vpack.c.b16 %v694, %v694
    %v759 = vpack.c.b16 %v695, %v695
    %v760 = vpack.c.b16 %v696, %v696
    %v761 = vpack.c.b16 %v697, %v697
    %v762 = vpack.c.b16 %v698, %v698
    %v763 = vpack.c.b16 %v699, %v699
    %v764 = vpack.c.b16 %v700, %v700
    %v765 = vpack.c.b16 %v701, %v701
    %v766 = vpack.c.b16 %v702, %v702
    %v767 = vpack.c.b16 %v703, %v703
    %v768 = vpack.c.b16 %v704, %v704
    %v769 = vpack.c.b16 %v705, %v705
    %v770 = vpack.c.b16 %v706, %v706
    %v771 = vpack.c.b16 %v707, %v707
    %v772 = vpack.c.b16 %v708, %v708
    %v773 = vpack.c.b16 %v709, %v709
    %v774 = vpack.c.b16 %v710, %v710
    %v775 = vpack.c.b16 %v711, %v711
    %v776 = vpack.c.b16 %v712, %v712
    %v777 = vpack.c.b16 %v713, %v713
    %v778 = vpack.c.b16 %v714, %v714
    %v779 = vpack.c.b16 %v715, %v715
    %v780 = vpack.c.b16 %v716, %v716
    %v781 = vpack.c.b16 %v717, %v717
    %v782 = vpack.c.b16 %v718, %v718
    %v783 = vpack.c.b16 %v719, %v719
    %v784 = vpack.c.b16 %v720, %v720
    %v785 = vpack.c.b16 %v721, %v721
    %v786 = vpack.c.b16 %v722, %v722
    %v787 = vpack.c.b16 %v723, %v723
    %v788 = vpack.c.b16 %v724, %v724
    %v789 = vpack.c.b16 %v725, %v725
    %v790 = vpack.c.b16 %v726, %v726
    %v791 = vpack.c.b16 %v727, %v727
    %v792 = vpack.c.b16 %v728, %v728
    %v793 = vpack.c.b16 %v729, %v729
    %v794 = vpack.c.b16 %v730, %v730
    %v795 = vpack.c.b16 %v731, %v731
    %v796 = vpack.c.b16 %v732, %v732
    %v797 = vpack.c.b16 %v733, %v733
    %v798 = vpack.c.b16 %v734, %v734
    %v799 = vpack.c.b16 %v735, %v735
    %v800 = vpack.c.b16 %v736, %v736
    %v801 = vpack.c.b16 %v737, %v737
    %v802 = vpack.c.b16 %v738, %v738
    %v803 = vpack.c.b16 %v739, %v739
    %v804 = vpack.c.b16 %v740, %v740
    %v805 = vpack.c.b16 %v741, %v741
    %v806 = vpack.c.b16 %v742, %v742
    %v807 = vpack.c.b16 %v743, %v743
    %v808 = vpack.c.b16 %v744, %v744
    %v809 = vpack.c.b16 %v745, %v745
    %v810 = vpack.c.b16 %v746, %v746
    %v811 = vpack.c.b16 %v747, %v747
    %v812 = vpack.c.b16 %v748, %v748
    %v813 = vpack.c.b16 %v749, %v749
    %v814 = vpack.c.b16 %v750, %v750
    %v815 = vpack.c.b16 %v751, %v751
    %v816 = vpack.c.b16 %v752, %v752
    %v817 = vpack.c.b16 %v753, %v753
    %v818 = vpack.c.b16 %v754, %v754
    %v819 = vpack.c.b16 %v755, %v755
    %v820 = vpack.c.b16 %v756, %v756
    %v821 = vpack.c.b16 %v757, %v757
    %vm886 = vcmask 27648
    %887 = vst.msk [vmem:[%s2] sm:$0xf] %vm886, %v758
    %888 = vst.msk [vmem:[%s2 + $0x4] sm:$0xf] %vm886, %v759
    %889 = vst.msk [vmem:[%s2 + $0x8] sm:$0xf] %vm886, %v760
    %890 = vst.msk [vmem:[%s2 + $0xc] sm:$0xf] %vm886, %v761
    %891 = vst.msk [vmem:[%s2 + $0x10] sm:$0xf] %vm886, %v762
    %892 = vst.msk [vmem:[%s2 + $0x14] sm:$0xf] %vm886, %v763
    %893 = vst.msk [vmem:[%s2 + $0x18] sm:$0xf] %vm886, %v764
    %894 = vst.msk [vmem:[%s2 + $0x1c] sm:$0xf] %vm886, %v765
    %895 = vst.msk [vmem:[%s2 + $0x20] sm:$0xf] %vm886, %v766
    %896 = vst.msk [vmem:[%s2 + $0x24] sm:$0xf] %vm886, %v767
    %897 = vst.msk [vmem:[%s2 + $0x28] sm:$0xf] %vm886, %v768
    %898 = vst.msk [vmem:[%s2 + $0x2c] sm:$0xf] %vm886, %v769
    %899 = vst.msk [vmem:[%s2 + $0x30] sm:$0xf] %vm886, %v770
    %900 = vst.msk [vmem:[%s2 + $0x34] sm:$0xf] %vm886, %v771
    %901 = vst.msk [vmem:[%s2 + $0x38] sm:$0xf] %vm886, %v772
    %902 = vst.msk [vmem:[%s2 + $0x3c] sm:$0xf] %vm886, %v773
    %903 = vst.msk [vmem:[%s2 + $0x40] sm:$0xf] %vm886, %v774
    %904 = vst.msk [vmem:[%s2 + $0x44] sm:$0xf] %vm886, %v775
    %905 = vst.msk [vmem:[%s2 + $0x48] sm:$0xf] %vm886, %v776
    %906 = vst.msk [vmem:[%s2 + $0x4c] sm:$0xf] %vm886, %v777
    %907 = vst.msk [vmem:[%s2 + $0x50] sm:$0xf] %vm886, %v778
    %908 = vst.msk [vmem:[%s2 + $0x54] sm:$0xf] %vm886, %v779
    %909 = vst.msk [vmem:[%s2 + $0x58] sm:$0xf] %vm886, %v780
    %910 = vst.msk [vmem:[%s2 + $0x5c] sm:$0xf] %vm886, %v781
    %911 = vst.msk [vmem:[%s2 + $0x60] sm:$0xf] %vm886, %v782
    %912 = vst.msk [vmem:[%s2 + $0x64] sm:$0xf] %vm886, %v783
    %913 = vst.msk [vmem:[%s2 + $0x68] sm:$0xf] %vm886, %v784
    %914 = vst.msk [vmem:[%s2 + $0x6c] sm:$0xf] %vm886, %v785
    %915 = vst.msk [vmem:[%s2 + $0x70] sm:$0xf] %vm886, %v786
    %916 = vst.msk [vmem:[%s2 + $0x74] sm:$0xf] %vm886, %v787
    %917 = vst.msk [vmem:[%s2 + $0x78] sm:$0xf] %vm886, %v788
    %918 = vst.msk [vmem:[%s2 + $0x7c] sm:$0xf] %vm886, %v789
    %919 = vst.msk [vmem:[%s2 + $0x80] sm:$0xf] %vm886, %v790
    %920 = vst.msk [vmem:[%s2 + $0x84] sm:$0xf] %vm886, %v791
    %921 = vst.msk [vmem:[%s2 + $0x88] sm:$0xf] %vm886, %v792
    %922 = vst.msk [vmem:[%s2 + $0x8c] sm:$0xf] %vm886, %v793
    %923 = vst.msk [vmem:[%s2 + $0x90] sm:$0xf] %vm886, %v794
    %924 = vst.msk [vmem:[%s2 + $0x94] sm:$0xf] %vm886, %v795
    %925 = vst.msk [vmem:[%s2 + $0x98] sm:$0xf] %vm886, %v796
    %926 = vst.msk [vmem:[%s2 + $0x9c] sm:$0xf] %vm886, %v797
    %927 = vst.msk [vmem:[%s2 + $0xa0] sm:$0xf] %vm886, %v798
    %928 = vst.msk [vmem:[%s2 + $0xa4] sm:$0xf] %vm886, %v799
    %929 = vst.msk [vmem:[%s2 + $0xa8] sm:$0xf] %vm886, %v800
    %930 = vst.msk [vmem:[%s2 + $0xac] sm:$0xf] %vm886, %v801
    %931 = vst.msk [vmem:[%s2 + $0xb0] sm:$0xf] %vm886, %v802
    %932 = vst.msk [vmem:[%s2 + $0xb4] sm:$0xf] %vm886, %v803
    %933 = vst.msk [vmem:[%s2 + $0xb8] sm:$0xf] %vm886, %v804
    %934 = vst.msk [vmem:[%s2 + $0xbc] sm:$0xf] %vm886, %v805
    %935 = vst.msk [vmem:[%s2 + $0xc0] sm:$0xf] %vm886, %v806
    %936 = vst.msk [vmem:[%s2 + $0xc4] sm:$0xf] %vm886, %v807
    %937 = vst.msk [vmem:[%s2 + $0xc8] sm:$0xf] %vm886, %v808
    %938 = vst.msk [vmem:[%s2 + $0xcc] sm:$0xf] %vm886, %v809
    %939 = vst.msk [vmem:[%s2 + $0xd0] sm:$0xf] %vm886, %v810
    %940 = vst.msk [vmem:[%s2 + $0xd4] sm:$0xf] %vm886, %v811
    %941 = vst.msk [vmem:[%s2 + $0xd8] sm:$0xf] %vm886, %v812
    %942 = vst.msk [vmem:[%s2 + $0xdc] sm:$0xf] %vm886, %v813
    %943 = vst.msk [vmem:[%s2 + $0xe0] sm:$0xf] %vm886, %v814
    %944 = vst.msk [vmem:[%s2 + $0xe4] sm:$0xf] %vm886, %v815
    %945 = vst.msk [vmem:[%s2 + $0xe8] sm:$0xf] %vm886, %v816
    %946 = vst.msk [vmem:[%s2 + $0xec] sm:$0xf] %vm886, %v817
    %947 = vst.msk [vmem:[%s2 + $0xf0] sm:$0xf] %vm886, %v818
    %948 = vst.msk [vmem:[%s2 + $0xf4] sm:$0xf] %vm886, %v819
    %949 = vst.msk [vmem:[%s2 + $0xf8] sm:$0xf] %vm886, %v820
    %950 = vst.msk [vmem:[%s2 + $0xfc] sm:$0xf] %vm886, %v821
    %v951 = vsel %vm240, %v376, 0.0
    %v952 = vsel %vm240, %v379, 0.0
    %v953 = vadd.f32 %v951, %v952
    %v954 = vsel %vm240, %v384, 0.0
    %v955 = vadd.f32 %v953, %v954
    %v956 = vsel %vm240, %v387, 0.0
    %v957 = vadd.f32 %v955, %v956
    %v958 = vsel %vm240, %v392, 0.0
    %v959 = vadd.f32 %v957, %v958
    %v960 = vsel %vm240, %v395, 0.0
    %v961 = vadd.f32 %v959, %v960
    %v962 = vsel %vm240, %v400, 0.0
    %v963 = vadd.f32 %v961, %v962
    %v964 = vsel %vm240, %v403, 0.0
    %v965 = vadd.f32 %v963, %v964
    %v966 = vsel %vm240, %v408, 0.0
    %v967 = vadd.f32 %v965, %v966
    %v968 = vsel %vm240, %v411, 0.0
    %v969 = vadd.f32 %v967, %v968
    %v970 = vsel %vm240, %v416, 0.0
    %v971 = vadd.f32 %v969, %v970
    %v972 = vsel %vm240, %v419, 0.0
    %v973 = vadd.f32 %v971, %v972
    %v974 = vsel %vm240, %v424, 0.0
    %v975 = vadd.f32 %v973, %v974
    %v976 = vsel %vm240, %v427, 0.0
    %v977 = vadd.f32 %v975, %v976
    %v978 = vsel %vm240, %v432, 0.0
    %v979 = vadd.f32 %v977, %v978
    %v980 = vsel %vm240, %v435, 0.0
    %v981 = vadd.f32 %v979, %v980
    %v982 = vsel %vm240, %v440, 0.0
    %v983 = vadd.f32 %v981, %v982
    %v984 = vsel %vm240, %v443, 0.0
    %v985 = vadd.f32 %v983, %v984
    %v986 = vsel %vm240, %v448, 0.0
    %v987 = vadd.f32 %v985, %v986
    %v988 = vsel %vm240, %v451, 0.0
    %v989 = vadd.f32 %v987, %v988
    %v990 = vsel %vm240, %v456, 0.0
    %v991 = vadd.f32 %v989, %v990
    %v992 = vsel %vm240, %v459, 0.0
    %v993 = vadd.f32 %v991, %v992
    %v994 = vsel %vm240, %v464, 0.0
    %v995 = vadd.f32 %v993, %v994
    %v996 = vsel %vm240, %v467, 0.0
    %v997 = vadd.f32 %v995, %v996
    %v998 = vsel %vm240, %v472, 0.0
    %v999 = vadd.f32 %v997, %v998
    %v1000 = vsel %vm240, %v475, 0.0
    %v1001 = vadd.f32 %v999, %v1000
    %v1002 = vsel %vm240, %v480, 0.0
    %v1003 = vadd.f32 %v1001, %v1002
    %v1004 = vsel %vm240, %v483, 0.0
    %v1005 = vadd.f32 %v1003, %v1004
    %v1006 = vsel %vm240, %v488, 0.0
    %v1007 = vadd.f32 %v1005, %v1006
    %v1008 = vsel %vm240, %v491, 0.0
    %v1009 = vadd.f32 %v1007, %v1008
    %v1010 = vsel %vm240, %v496, 0.0
    %v1011 = vadd.f32 %v1009, %v1010
    %v1012 = vsel %vm240, %v499, 0.0
    %v1013 = vadd.f32 %v1011, %v1012
    %v1014 = vsel %vm240, %v504, 0.0
    %v1015 = vadd.f32 %v1013, %v1014
    %v1016 = vsel %vm240, %v507, 0.0
    %v1017 = vadd.f32 %v1015, %v1016
    %v1018 = vsel %vm240, %v512, 0.0
    %v1019 = vadd.f32 %v1017, %v1018
    %v1020 = vsel %vm240, %v515, 0.0
    %v1021 = vadd.f32 %v1019, %v1020
    %v1022 = vsel %vm240, %v520, 0.0
    %v1023 = vadd.f32 %v1021, %v1022
    %v1024 = vsel %vm240, %v523, 0.0
    %v1025 = vadd.f32 %v1023, %v1024
    %v1026 = vsel %vm240, %v528, 0.0
    %v1027 = vadd.f32 %v1025, %v1026
    %v1028 = vsel %vm240, %v531, 0.0
    %v1029 = vadd.f32 %v1027, %v1028
    %v1030 = vsel %vm240, %v536, 0.0
    %v1031 = vadd.f32 %v1029, %v1030
    %v1032 = vsel %vm240, %v539, 0.0
    %v1033 = vadd.f32 %v1031, %v1032
    %v1034 = vsel %vm240, %v544, 0.0
    %v1035 = vadd.f32 %v1033, %v1034
    %v1036 = vsel %vm240, %v547, 0.0
    %v1037 = vadd.f32 %v1035, %v1036
    %v1038 = vsel %vm240, %v552, 0.0
    %v1039 = vadd.f32 %v1037, %v1038
    %v1040 = vsel %vm240, %v555, 0.0
    %v1041 = vadd.f32 %v1039, %v1040
    %v1042 = vsel %vm240, %v560, 0.0
    %v1043 = vadd.f32 %v1041, %v1042
    %v1044 = vsel %vm240, %v563, 0.0
    %v1045 = vadd.f32 %v1043, %v1044
    %v1046 = vsel %vm240, %v568, 0.0
    %v1047 = vadd.f32 %v1045, %v1046
    %v1048 = vsel %vm240, %v571, 0.0
    %v1049 = vadd.f32 %v1047, %v1048
    %v1050 = vsel %vm240, %v576, 0.0
    %v1051 = vadd.f32 %v1049, %v1050
    %v1052 = vsel %vm240, %v579, 0.0
    %v1053 = vadd.f32 %v1051, %v1052
    %v1054 = vsel %vm240, %v584, 0.0
    %v1055 = vadd.f32 %v1053, %v1054
    %v1056 = vsel %vm240, %v587, 0.0
    %v1057 = vadd.f32 %v1055, %v1056
    %v1058 = vsel %vm240, %v592, 0.0
    %v1059 = vadd.f32 %v1057, %v1058
    %v1060 = vsel %vm240, %v595, 0.0
    %v1061 = vadd.f32 %v1059, %v1060
    %v1062 = vsel %vm240, %v600, 0.0
    %v1063 = vadd.f32 %v1061, %v1062
    %v1064 = vsel %vm240, %v603, 0.0
    %v1065 = vadd.f32 %v1063, %v1064
    %v1066 = vsel %vm240, %v608, 0.0
    %v1067 = vadd.f32 %v1065, %v1066
    %v1068 = vsel %vm240, %v611, 0.0
    %v1069 = vadd.f32 %v1067, %v1068
    %v1070 = vsel %vm240, %v616, 0.0
    %v1071 = vadd.f32 %v1069, %v1070
    %v1072 = vsel %vm240, %v619, 0.0
    %v1073 = vadd.f32 %v1071, %v1072
    %v1074 = vsel %vm240, %v624, 0.0
    %v1075 = vadd.f32 %v1073, %v1074
    %v1076 = vsel %vm240, %v627, 0.0
    %v1077 = vadd.f32 %v1075, %v1076
    %v1078 = vrot.slane %v1077, 4
    %v1079 = vadd.f32 %v1077, %v1078
    %v1080 = vrot.slane %v1079, 2
    %v1081 = vadd.f32 %v1079, %v1080
    %v1082 = vrot.slane %v1081, 1
    %v1083 = vadd.f32 %v1081, %v1082
    %v1084 = vmul.f32 %v376, %v376
    %v1085 = vmul.f32 %v379, %v379
    %v1086 = vmul.f32 %v384, %v384
    %v1087 = vmul.f32 %v387, %v387
    %v1088 = vmul.f32 %v392, %v392
    %v1089 = vmul.f32 %v395, %v395
    %v1090 = vmul.f32 %v400, %v400
    %v1091 = vmul.f32 %v403, %v403
    %v1092 = vmul.f32 %v408, %v408
    %v1093 = vmul.f32 %v411, %v411
    %v1094 = vmul.f32 %v416, %v416
    %v1095 = vmul.f32 %v419, %v419
    %v1096 = vmul.f32 %v424, %v424
    %v1097 = vmul.f32 %v427, %v427
    %v1098 = vmul.f32 %v432, %v432
    %v1099 = vmul.f32 %v435, %v435
    %v1100 = vmul.f32 %v440, %v440
    %v1101 = vmul.f32 %v443, %v443
    %v1102 = vmul.f32 %v448, %v448
    %v1103 = vmul.f32 %v451, %v451
    %v1104 = vmul.f32 %v456, %v456
    %v1105 = vmul.f32 %v459, %v459
    %v1106 = vmul.f32 %v464, %v464
    %v1107 = vmul.f32 %v467, %v467
    %v1108 = vmul.f32 %v472, %v472
    %v1109 = vmul.f32 %v475, %v475
    %v1110 = vmul.f32 %v480, %v480
    %v1111 = vmul.f32 %v483, %v483
    %v1112 = vmul.f32 %v488, %v488
    %v1113 = vmul.f32 %v491, %v491
    %v1114 = vmul.f32 %v496, %v496
    %v1115 = vmul.f32 %v499, %v499
    %v1116 = vmul.f32 %v504, %v504
    %v1117 = vmul.f32 %v507, %v507
    %v1118 = vmul.f32 %v512, %v512
    %v1119 = vmul.f32 %v515, %v515
    %v1120 = vmul.f32 %v520, %v520
    %v1121 = vmul.f32 %v523, %v523
    %v1122 = vmul.f32 %v528, %v528
    %v1123 = vmul.f32 %v531, %v531
    %v1124 = vmul.f32 %v536, %v536
    %v1125 = vmul.f32 %v539, %v539
    %v1126 = vmul.f32 %v544, %v544
    %v1127 = vmul.f32 %v547, %v547
    %v1128 = vmul.f32 %v552, %v552
    %v1129 = vmul.f32 %v555, %v555
    %v1130 = vmul.f32 %v560, %v560
    %v1131 = vmul.f32 %v563, %v563
    %v1132 = vmul.f32 %v568, %v568
    %v1133 = vmul.f32 %v571, %v571
    %v1134 = vmul.f32 %v576, %v576
    %v1135 = vmul.f32 %v579, %v579
    %v1136 = vmul.f32 %v584, %v584
    %v1137 = vmul.f32 %v587, %v587
    %v1138 = vmul.f32 %v592, %v592
    %v1139 = vmul.f32 %v595, %v595
    %v1140 = vmul.f32 %v600, %v600
    %v1141 = vmul.f32 %v603, %v603
    %v1142 = vmul.f32 %v608, %v608
    %v1143 = vmul.f32 %v611, %v611
    %v1144 = vmul.f32 %v616, %v616
    %v1145 = vmul.f32 %v619, %v619
    %v1146 = vmul.f32 %v624, %v624
    %v1147 = vmul.f32 %v627, %v627
    %v1148 = vsel %vm240, %v1084, 0.0
    %v1149 = vsel %vm240, %v1085, 0.0
    %v1150 = vadd.f32 %v1148, %v1149
    %v1151 = vsel %vm240, %v1086, 0.0
    %v1152 = vadd.f32 %v1150, %v1151
    %v1153 = vsel %vm240, %v1087, 0.0
    %v1154 = vadd.f32 %v1152, %v1153
    %v1155 = vsel %vm240, %v1088, 0.0
    %v1156 = vadd.f32 %v1154, %v1155
    %v1157 = vsel %vm240, %v1089, 0.0
    %v1158 = vadd.f32 %v1156, %v1157
    %v1159 = vsel %vm240, %v1090, 0.0
    %v1160 = vadd.f32 %v1158, %v1159
    %v1161 = vsel %vm240, %v1091, 0.0
    %v1162 = vadd.f32 %v1160, %v1161
    %v1163 = vsel %vm240, %v1092, 0.0
    %v1164 = vadd.f32 %v1162, %v1163
    %v1165 = vsel %vm240, %v1093, 0.0
    %v1166 = vadd.f32 %v1164, %v1165
    %v1167 = vsel %vm240, %v1094, 0.0
    %v1168 = vadd.f32 %v1166, %v1167
    %v1169 = vsel %vm240, %v1095, 0.0
    %v1170 = vadd.f32 %v1168, %v1169
    %v1171 = vsel %vm240, %v1096, 0.0
    %v1172 = vadd.f32 %v1170, %v1171
    %v1173 = vsel %vm240, %v1097, 0.0
    %v1174 = vadd.f32 %v1172, %v1173
    %v1175 = vsel %vm240, %v1098, 0.0
    %v1176 = vadd.f32 %v1174, %v1175
    %v1177 = vsel %vm240, %v1099, 0.0
    %v1178 = vadd.f32 %v1176, %v1177
    %v1179 = vsel %vm240, %v1100, 0.0
    %v1180 = vadd.f32 %v1178, %v1179
    %v1181 = vsel %vm240, %v1101, 0.0
    %v1182 = vadd.f32 %v1180, %v1181
    %v1183 = vsel %vm240, %v1102, 0.0
    %v1184 = vadd.f32 %v1182, %v1183
    %v1185 = vsel %vm240, %v1103, 0.0
    %v1186 = vadd.f32 %v1184, %v1185
    %v1187 = vsel %vm240, %v1104, 0.0
    %v1188 = vadd.f32 %v1186, %v1187
    %v1189 = vsel %vm240, %v1105, 0.0
    %v1190 = vadd.f32 %v1188, %v1189
    %v1191 = vsel %vm240, %v1106, 0.0
    %v1192 = vadd.f32 %v1190, %v1191
    %v1193 = vsel %vm240, %v1107, 0.0
    %v1194 = vadd.f32 %v1192, %v1193
    %v1195 = vsel %vm240, %v1108, 0.0
    %v1196 = vadd.f32 %v1194, %v1195
    %v1197 = vsel %vm240, %v1109, 0.0
    %v1198 = vadd.f32 %v1196, %v1197
    %v1199 = vsel %vm240, %v1110, 0.0
    %v1200 = vadd.f32 %v1198, %v1199
    %v1201 = vsel %vm240, %v1111, 0.0
    %v1202 = vadd.f32 %v1200, %v1201
    %v1203 = vsel %vm240, %v1112, 0.0
    %v1204 = vadd.f32 %v1202, %v1203
    %v1205 = vsel %vm240, %v1113, 0.0
    %v1206 = vadd.f32 %v1204, %v1205
    %v1207 = vsel %vm240, %v1114, 0.0
    %v1208 = vadd.f32 %v1206, %v1207
    %v1209 = vsel %vm240, %v1115, 0.0
    %v1210 = vadd.f32 %v1208, %v1209
    %v1211 = vsel %vm240, %v1116, 0.0
    %v1212 = vadd.f32 %v1210, %v1211
    %v1213 = vsel %vm240, %v1117, 0.0
    %v1214 = vadd.f32 %v1212, %v1213
    %v1215 = vsel %vm240, %v1118, 0.0
    %v1216 = vadd.f32 %v1214, %v1215
    %v1217 = vsel %vm240, %v1119, 0.0
    %v1218 = vadd.f32 %v1216, %v1217
    %v1219 = vsel %vm240, %v1120, 0.0
    %v1220 = vadd.f32 %v1218, %v1219
    %v1221 = vsel %vm240, %v1121, 0.0
    %v1222 = vadd.f32 %v1220, %v1221
    %v1223 = vsel %vm240, %v1122, 0.0
    %v1224 = vadd.f32 %v1222, %v1223
    %v1225 = vsel %vm240, %v1123, 0.0
    %v1226 = vadd.f32 %v1224, %v1225
    %v1227 = vsel %vm240, %v1124, 0.0
    %v1228 = vadd.f32 %v1226, %v1227
    %v1229 = vsel %vm240, %v1125, 0.0
    %v1230 = vadd.f32 %v1228, %v1229
    %v1231 = vsel %vm240, %v1126, 0.0
    %v1232 = vadd.f32 %v1230, %v1231
    %v1233 = vsel %vm240, %v1127, 0.0
    %v1234 = vadd.f32 %v1232, %v1233
    %v1235 = vsel %vm240, %v1128, 0.0
    %v1236 = vadd.f32 %v1234, %v1235
    %v1237 = vsel %vm240, %v1129, 0.0
    %v1238 = vadd.f32 %v1236, %v1237
    %v1239 = vsel %vm240, %v1130, 0.0
    %v1240 = vadd.f32 %v1238, %v1239
    %v1241 = vsel %vm240, %v1131, 0.0
    %v1242 = vadd.f32 %v1240, %v1241
    %v1243 = vsel %vm240, %v1132, 0.0
    %v1244 = vadd.f32 %v1242, %v1243
    %v1245 = vsel %vm240, %v1133, 0.0
    %v1246 = vadd.f32 %v1244, %v1245
    %v1247 = vsel %vm240, %v1134, 0.0
    %v1248 = vadd.f32 %v1246, %v1247
    %v1249 = vsel %vm240, %v1135, 0.0
    %v1250 = vadd.f32 %v1248, %v1249
    %v1251 = vsel %vm240, %v1136, 0.0
    %v1252 = vadd.f32 %v1250, %v1251
    %v1253 = vsel %vm240, %v1137, 0.0
    %v1254 = vadd.f32 %v1252, %v1253
    %v1255 = vsel %vm240, %v1138, 0.0
    %v1256 = vadd.f32 %v1254, %v1255
    %v1257 = vsel %vm240, %v1139, 0.0
    %v1258 = vadd.f32 %v1256, %v1257
    %v1259 = vsel %vm240, %v1140, 0.0
    %v1260 = vadd.f32 %v1258, %v1259
    %v1261 = vsel %vm240, %v1141, 0.0
    %v1262 = vadd.f32 %v1260, %v1261
    %v1263 = vsel %vm240, %v1142, 0.0
    %v1264 = vadd.f32 %v1262, %v1263
    %v1265 = vsel %vm240, %v1143, 0.0
    %v1266 = vadd.f32 %v1264, %v1265
    %v1267 = vsel %vm240, %v1144, 0.0
    %v1268 = vadd.f32 %v1266, %v1267
    %v1269 = vsel %vm240, %v1145, 0.0
    %v1270 = vadd.f32 %v1268, %v1269
    %v1271 = vsel %vm240, %v1146, 0.0
    %v1272 = vadd.f32 %v1270, %v1271
    %v1273 = vsel %vm240, %v1147, 0.0
    %v1274 = vadd.f32 %v1272, %v1273
    %v1275 = vrot.slane %v1274, 4
    %v1276 = vadd.f32 %v1274, %v1275
    %v1277 = vrot.slane %v1276, 2
    %v1278 = vadd.f32 %v1276, %v1277
    %v1279 = vrot.slane %v1278, 1
    %v1280 = vadd.f32 %v1278, %v1279
    %vm1281 = vcmask 1040384
    %v1282 = vsel %vm1281, %v1083, %v1280
    %vm1283 = vcmask 25600
    %1284 = vst.msk [vmem:[#allocation2] sm:$0x3] %vm1283, %v1282
    // Predicated region
    $region10: #{tpu_custom_call.1} parent=1 // pred_check
      _
    $region11: #{tpu_custom_call.1} parent=1 // pred_check_branch
      %1286 = sbr.rel (0) target = $region13
    $region12: #{tpu_custom_call.1} parent=1 // pred_region
      _
    $region13: #{tpu_custom_call.1} parent=1 // pred_fallthru
      _
    // Predicated region
    $region14: #{tpu_custom_call.1} parent=1 // pred_check
      _
    $region15: #{tpu_custom_call.1} parent=1 // pred_check_branch
      %1288 = sbr.rel (0) target = $region17
    $region16: #{tpu_custom_call.1} parent=1 // pred_region
      %s1290 = ssub.s32 32, 32
      %1291 = vsyncadd [#allocation3], %s1290
      %s1293 = sshll.u32 [#allocation2], 4
      %s1294 = int_to_ptr.vmem [resolvable:$true] %s1293
      %1296 = dma.vmem_to_hbm [thread:$0]  %s1294, 32, %s3, [#allocation3]
    $region17: #{tpu_custom_call.1} parent=1 // pred_fallthru
      _
    // Predicated region
    $region18: #{tpu_custom_call.1} parent=1 // pred_check
      _
    $region19: #{tpu_custom_call.1} parent=1 // pred_check_branch
      %1298 = sbr.rel (0) target = $region21
    $region20: #{tpu_custom_call.1} parent=1 // pred_region
      _
    $region21: #{tpu_custom_call.1} parent=1 // pred_fallthru
      _
    // Predicated region
    $region22: #{tpu_custom_call.1} parent=1 // pred_check
      _
    $region23: #{tpu_custom_call.1} parent=1 // pred_check_branch
      %1300 = sbr.rel (0) target = $region25
    $region24: #{tpu_custom_call.1} parent=1 // pred_region
      %1301 = dma.done [#allocation3], 32
    $region25: #{tpu_custom_call.1} parent=1 // pred_fallthru
      _
    %1302 = vsyncpa [#allocation3], 1

</llo_original>
